<compile_context>
chip_gen: v7x
topology: tpu7x:2x2x1
jax: 0.10.0
libtpu: 0.0.40
codegen_flags: <defaults>
</compile_context>

<pallas_src>
import jax
import jax.numpy as jnp
from jax import lax
from jax.experimental import pallas as pl
from jax.experimental.pallas import tpu as pltpu

H = 64            # nn.LSTM(input_size, 64)
HP = 128          # per-gate width padded to a full 128-lane vreg group
G = 4 * HP        # fused, lane-aligned gate width (512)


def _round_up(n, m):
    return ((n + m - 1) // m) * m


def _make_lstm_kernel(T, T_CHUNK, B_TILE, mask_tail):
    # unroll the recurrence loop where the trip count allows it (LLO visibility)
    if T_CHUNK <= 8:
        unroll = True
    elif T_CHUNK % 4 == 0:
        unroll = 4
    elif T_CHUNK % 2 == 0:
        unroll = 2
    else:
        unroll = 1

    def kernel(x_ref, wih_ref, whh_ref, b_ref, wfc_ref, bfc_ref,
               out_ref, gx_sc, h_sc, c_sc):
        c_idx = pl.program_id(1)
        n_chunks = pl.num_programs(1)

        @pl.when(c_idx == 0)
        def _():
            h_sc[...] = jnp.zeros_like(h_sc)
            c_sc[...] = jnp.zeros_like(c_sc)

        # Input projection of the whole chunk (no recurrence dependence) as one
        # big GEMM, with the fused bias folded in once:
        #   (T_CHUNK*B_TILE, I) @ (I, 4*HP) + (1, 4*HP)
        gx_sc[...] = (
            jnp.dot(x_ref[0], wih_ref[...], preferred_element_type=jnp.float32)
            + b_ref[...])

        whh = whh_ref[...]          # (HP, 4*HP), loop invariant

        def step(t, carry):
            h, c = carry
            row = pl.multiple_of(t * B_TILE, B_TILE)
            gates = (gx_sc[pl.ds(row, B_TILE), :]
                     + jnp.dot(h, whh, preferred_element_type=jnp.float32))
            # lane-aligned gate slices (PyTorch order i, f, g, o)
            i_g = jax.nn.sigmoid(gates[:, 0 * HP:1 * HP])
            f_g = jax.nn.sigmoid(gates[:, 1 * HP:2 * HP])
            g_g = jnp.tanh(gates[:, 2 * HP:3 * HP])
            o_g = jax.nn.sigmoid(gates[:, 3 * HP:4 * HP])
            c_new = f_g * c + i_g * g_g
            h_new = o_g * jnp.tanh(c_new)
            if mask_tail:
                valid = (c_idx * T_CHUNK + t) < T
                h_new = jnp.where(valid, h_new, h)
                c_new = jnp.where(valid, c_new, c)
            return h_new, c_new

        h_f, c_f = lax.fori_loop(0, T_CHUNK, step, (h_sc[...], c_sc[...]),
                                 unroll=unroll)
        h_sc[...] = h_f
        c_sc[...] = c_f

        @pl.when(c_idx == n_chunks - 1)
        def _():
            # Linear(64, 1) as a lane reduction + SMEM bias, then sigmoid.
            logits = (jnp.sum(h_f * wfc_ref[...], axis=-1, keepdims=True)
                      + bfc_ref[0])
            out_ref[...] = jax.nn.sigmoid(logits).astype(out_ref.dtype)

    return kernel


def lstm_model_forward(x, params, *, t_chunk=None):
    """x: (B, T, input_size) float32, batch_first (like the PyTorch module)."""
    w_ih, w_hh, b_ih, b_hh, w_fc, b_fc = (
        params["w_ih"], params["w_hh"], params["b_ih"],
        params["b_hh"], params["w_fc"], params["b_fc"])

    B, T, I = x.shape

    # ---------------- tiling choices ----------------
    B_TILE = min(_round_up(B, 8), 128)              # sublane-aligned batch tile
    nbt = -(-B // B_TILE)                           # batch tiles ("parallel" on v7x)
    B_pad = nbt * B_TILE
    if t_chunk is None:
        T_CHUNK = max(1, min(T, 1024 // B_TILE))    # chunk gates stay ~<= 2 MiB VMEM
    else:
        T_CHUNK = max(1, min(int(t_chunk), T))
    n_chunks = -(-T // T_CHUNK)
    T_pad = n_chunks * T_CHUNK
    mask_tail = (T_pad != T)
    rows = T_CHUNK * B_TILE

    # ---------------- lane-aligned fused weights (128 cols per gate) ----------------
    wih_p = jnp.zeros((I, G), jnp.float32)
    whh_p = jnp.zeros((HP, G), jnp.float32)
    b_p = jnp.zeros((1, G), jnp.float32)
    b_sum = (b_ih + b_hh).astype(jnp.float32)
    for g in range(4):
        wih_p = wih_p.at[:, g * HP:g * HP + H].set(
            w_ih[g * H:(g + 1) * H, :].T.astype(jnp.float32))
        whh_p = whh_p.at[:H, g * HP:g * HP + H].set(
            w_hh[g * H:(g + 1) * H, :].T.astype(jnp.float32))
        b_p = b_p.at[0, g * HP:g * HP + H].set(b_sum[g * H:(g + 1) * H])
    wfc_p = jnp.zeros((1, HP), jnp.float32).at[0, :H].set(
        w_fc[0, :].astype(jnp.float32))
    bfc = b_fc.reshape(1).astype(jnp.float32)

    # ---------------- time-major, batch-tiled, row-flattened x ----------------
    # per batch tile: row index = t * B_TILE + b_local
    x_p = jnp.zeros((B_pad, T_pad, I), jnp.float32).at[:B, :T, :].set(
        x.astype(jnp.float32))
    x_flat = (x_p.reshape(nbt, B_TILE, T_pad, I)
                 .transpose(0, 2, 1, 3)              # (nbt, T_pad, B_TILE, I)
                 .reshape(nbt, T_pad * B_TILE, I))

    kernel = _make_lstm_kernel(T, T_CHUNK, B_TILE, mask_tail)

    out = pl.pallas_call(
        kernel,
        out_shape=jax.ShapeDtypeStruct((B_pad, 1), jnp.float32),
        grid_spec=pltpu.PrefetchScalarGridSpec(
            num_scalar_prefetch=0,
            grid=(nbt, n_chunks),
            in_specs=[
                pl.BlockSpec((1, rows, I), lambda b, c: (b, c, 0)),   # x chunk
                pl.BlockSpec((I, G), lambda b, c: (0, 0)),            # W_ih fused (padded)
                pl.BlockSpec((HP, G), lambda b, c: (0, 0)),           # W_hh fused (padded)
                pl.BlockSpec((1, G), lambda b, c: (0, 0)),            # b_ih + b_hh (padded)
                pl.BlockSpec((1, HP), lambda b, c: (0, 0)),           # w_fc row (padded)
                pl.BlockSpec(memory_space=pltpu.MemorySpace.SMEM),    # b_fc scalar
            ],
            out_specs=pl.BlockSpec((B_TILE, 1), lambda b, c: (b, 0)),
            scratch_shapes=[
                pltpu.VMEM((rows, G), jnp.float32),     # precomputed chunk gates
                pltpu.VMEM((B_TILE, HP), jnp.float32),  # h state
                pltpu.VMEM((B_TILE, HP), jnp.float32),  # c state
            ],
        ),
        compiler_params=pltpu.CompilerParams(
            dimension_semantics=("parallel", "arbitrary"),
            vmem_limit_bytes=32 * 1024 * 1024),
    )(x_flat, wih_p, whh_p, b_p, wfc_p, bfc)
    return out[:B]


def init_params(key, input_size):
    """Deterministic PyTorch-style init: U(-1/sqrt(H), 1/sqrt(H))."""
    k = 1.0 / jnp.sqrt(jnp.float32(H))
    ks = jax.random.split(key, 6)
    u = lambda kk, shape: jax.random.uniform(kk, shape, jnp.float32, -k, k)
    return {
        "w_ih": u(ks[0], (4 * H, input_size)),
        "w_hh": u(ks[1], (4 * H, H)),
        "b_ih": u(ks[2], (4 * H,)),
        "b_hh": u(ks[3], (4 * H,)),
        "w_fc": u(ks[4], (1, H)),
        "b_fc": u(ks[5], (1,)),
    }


def reference_forward(x, params):
    """Pure-JAX reference of the PyTorch forward (for sanity checking)."""
    B, T, _ = x.shape
    h = jnp.zeros((B, H), jnp.float32)
    c = jnp.zeros((B, H), jnp.float32)
    hp = "highest"
    for t in range(T):
        g = (jnp.dot(x[:, t, :], params["w_ih"].T, precision=hp) + params["b_ih"]
             + jnp.dot(h, params["w_hh"].T, precision=hp) + params["b_hh"])
        i = jax.nn.sigmoid(g[:, 0 * H:1 * H])
        f = jax.nn.sigmoid(g[:, 1 * H:2 * H])
        gg = jnp.tanh(g[:, 2 * H:3 * H])
        o = jax.nn.sigmoid(g[:, 3 * H:4 * H])
        c = f * c + i * gg
        h = o * jnp.tanh(c)
    return jax.nn.sigmoid(jnp.dot(h, params["w_fc"].T, precision=hp)
                          + params["b_fc"])


if __name__ == "__main__":
    INPUT_SIZE = 16
    key = jax.random.PRNGKey(0)
    k_x, k_p, k_x2, k_x3 = jax.random.split(key, 4)
    params = init_params(k_p, INPUT_SIZE)

    # 1) The module's actual shape: X reshaped to (N, 1, input_size) -> seq_len = 1.
    B, T = 4, 1
    x = jax.random.normal(k_x, (B, T, INPUT_SIZE), jnp.float32)
    out = jax.block_until_ready(lstm_model_forward(x, params))
    ref = reference_forward(x, params)
    assert out.shape == (B, 1)
    assert jnp.allclose(out, ref, atol=1e-4, rtol=1e-4)

    # 2) Longer sequence (single in-kernel chunk, unrolled recurrence).
    x2 = jax.random.normal(k_x2, (4, 6, INPUT_SIZE), jnp.float32)
    out2 = jax.block_until_ready(lstm_model_forward(x2, params))
    ref2 = reference_forward(x2, params)
    assert jnp.allclose(out2, ref2, atol=1e-4, rtol=1e-4)

    # 3) Multi-chunk path with ragged (masked) tail: T=5, chunk=2 -> 3 chunks.
    x3 = jax.random.normal(k_x3, (4, 5, INPUT_SIZE), jnp.float32)
    out3 = jax.block_until_ready(lstm_model_forward(x3, params, t_chunk=2))
    ref3 = reference_forward(x3, params)
    assert jnp.allclose(out3, ref3, atol=1e-4, rtol=1e-4)

    print("KERNEL_OK")
</pallas_src>

<mosaic_0001>
module attributes {stable_mosaic.version = 11 : i64} {
  func.func @kernel(%arg0: i32, %arg1: i32, %arg2: memref<1x8x16xf32, #tpu.memory_space<vmem>>, %arg3: memref<16x512xf32, #tpu.memory_space<vmem>>, %arg4: memref<128x512xf32, #tpu.memory_space<vmem>>, %arg5: memref<1x512xf32, #tpu.memory_space<vmem>>, %arg6: memref<1x128xf32, #tpu.memory_space<vmem>>, %arg7: memref<1xf32, #tpu.memory_space<smem>>, %arg8: memref<8x1xf32, #tpu.memory_space<vmem>>, %arg9: memref<8x512xf32, #tpu.memory_space<vmem>>, %arg10: memref<8x128xf32, #tpu.memory_space<vmem>>, %arg11: memref<8x128xf32, #tpu.memory_space<vmem>>) attributes {dimension_semantics = [#tpu.dimension_semantics<parallel>, #tpu.dimension_semantics<arbitrary>], iteration_bounds = array<i64: 1, 1>, scalar_prefetch = 0 : i64, scratch_operands = 3 : i64, tpu.core_type = #tpu.core_type<tc>, window_params = [{transform_indices = @transform_0, window_bounds = array<i64: 1, 8, 16>}, {pipeline_mode = #tpu.pipeline_mode<synchronous>, transform_indices = @transform_1, window_bounds = array<i64: 16, 512>}, {pipeline_mode = #tpu.pipeline_mode<synchronous>, transform_indices = @transform_2, window_bounds = array<i64: 128, 512>}, {pipeline_mode = #tpu.pipeline_mode<synchronous>, transform_indices = @transform_3, window_bounds = array<i64: 1, 512>}, {pipeline_mode = #tpu.pipeline_mode<synchronous>, transform_indices = @transform_4, window_bounds = array<i64: 1, 128>}, {transform_indices = @transform_5, window_bounds = array<i64: 1>}, {transform_indices = @transform_6, window_bounds = array<i64: 8, 1>}]} {
    %c0_i32 = arith.constant 0 : i32
    %0 = arith.cmpi eq, %arg1, %c0_i32 : i32
    %1 = arith.extui %0 : i1 to i32
    %c0_i32_0 = arith.constant 0 : i32
    %2 = arith.cmpi ne, %1, %c0_i32_0 : i32
    scf.if %2 {
      %cst_27 = arith.constant 0.000000e+00 : f32
      %50 = vector.broadcast %cst_27 : f32 to vector<8x128xf32>
      %c0_28 = arith.constant 0 : index
      %c0_29 = arith.constant 0 : index
      %51 = vector.load %arg10[%c0_28, %c0_29] : memref<8x128xf32, #tpu.memory_space<vmem>>, vector<8x128xf32>
      tpu.vector_store %arg10[%c0_28, %c0_29], %50 {strides = array<i32>} : memref<8x128xf32, #tpu.memory_space<vmem>>, vector<8x128xf32>,
      %cst_30 = arith.constant 0.000000e+00 : f32
      %52 = vector.broadcast %cst_30 : f32 to vector<8x128xf32>
      %c0_31 = arith.constant 0 : index
      %c0_32 = arith.constant 0 : index
      %53 = vector.load %arg11[%c0_31, %c0_32] : memref<8x128xf32, #tpu.memory_space<vmem>>, vector<8x128xf32>
      tpu.vector_store %arg11[%c0_31, %c0_32], %52 {strides = array<i32>} : memref<8x128xf32, #tpu.memory_space<vmem>>, vector<8x128xf32>,
    } else {
    }
    %c0 = arith.constant 0 : index
    %c0_1 = arith.constant 0 : index
    %c0_2 = arith.constant 0 : index
    %3 = vector.load %arg2[%c0, %c0_1, %c0_2] : memref<1x8x16xf32, #tpu.memory_space<vmem>>, vector<1x8x16xf32>
    %4 = vector.shape_cast %3 : vector<1x8x16xf32> to vector<8x16xf32>
    %c0_3 = arith.constant 0 : index
    %c0_4 = arith.constant 0 : index
    %5 = vector.load %arg3[%c0_3, %c0_4] : memref<16x512xf32, #tpu.memory_space<vmem>>, vector<16x512xf32>
    %cst = arith.constant dense<0.000000e+00> : vector<8x512xf32>
    %6 = tpu.matmul %4, %5, %cst {dimension_numbers = #tpu.dot_dimension_numbers<[1], [0], [0], [1], [0, 0, 1, 1], [], []>} : vector<8x16xf32>, vector<16x512xf32>, vector<8x512xf32> -> vector<8x512xf32>
    %c0_5 = arith.constant 0 : index
    %c0_6 = arith.constant 0 : index
    %7 = vector.load %arg5[%c0_5, %c0_6] : memref<1x512xf32, #tpu.memory_space<vmem>>, vector<1x512xf32>
    %8 = vector.broadcast %7 : vector<1x512xf32> to vector<8x512xf32>
    %9 = arith.addf %6, %8 : vector<8x512xf32>
    %c0_7 = arith.constant 0 : index
    %c0_8 = arith.constant 0 : index
    %10 = vector.load %arg9[%c0_7, %c0_8] : memref<8x512xf32, #tpu.memory_space<vmem>>, vector<8x512xf32>
    tpu.vector_store %arg9[%c0_7, %c0_8], %9 {strides = array<i32>} : memref<8x512xf32, #tpu.memory_space<vmem>>, vector<8x512xf32>,
    %c0_9 = arith.constant 0 : index
    %c0_10 = arith.constant 0 : index
    %11 = vector.load %arg4[%c0_9, %c0_10] : memref<128x512xf32, #tpu.memory_space<vmem>>, vector<128x512xf32>
    %c0_11 = arith.constant 0 : index
    %c0_12 = arith.constant 0 : index
    %12 = vector.load %arg10[%c0_11, %c0_12] : memref<8x128xf32, #tpu.memory_space<vmem>>, vector<8x128xf32>
    %c0_13 = arith.constant 0 : index
    %c0_14 = arith.constant 0 : index
    %13 = vector.load %arg11[%c0_13, %c0_14] : memref<8x128xf32, #tpu.memory_space<vmem>>, vector<8x128xf32>
    %c0_i32_15 = arith.constant 0 : i32
    %c8_i32 = arith.constant 8 : i32
    %14 = arith.muli %c0_i32_15, %c8_i32 : i32
    %15 = tpu.assume_multiple %14, 8 : i32
    %16 = arith.index_cast %15 : i32 to index
    %c0_16 = arith.constant 0 : index
    %17 = vector.load %arg9[%16, %c0_16] : memref<8x512xf32, #tpu.memory_space<vmem>>, vector<8x512xf32>
    %cst_17 = arith.constant dense<0.000000e+00> : vector<8x512xf32>
    %18 = tpu.matmul %12, %11, %cst_17 {dimension_numbers = #tpu.dot_dimension_numbers<[1], [0], [0], [1], [0, 0, 1, 1], [], []>} : vector<8x128xf32>, vector<128x512xf32>, vector<8x512xf32> -> vector<8x512xf32>
    %19 = arith.addf %17, %18 : vector<8x512xf32>
    %20 = vector.extract_strided_slice %19 {offsets = [0, 0], sizes = [8, 128], strides = [1, 1]} : vector<8x512xf32> to vector<8x128xf32>
    %21 = arith.negf %20 : vector<8x128xf32>
    %22 = math.exp %21 : vector<8x128xf32>
    %cst_18 = arith.constant 1.000000e+00 : f32
    %23 = vector.broadcast %cst_18 : f32 to vector<8x128xf32>
    %24 = arith.addf %23, %22 : vector<8x128xf32>
    %25 = arith.divf %23, %24 : vector<8x128xf32>
    %26 = vector.extract_strided_slice %19 {offsets = [0, 128], sizes = [8, 128], strides = [1, 1]} : vector<8x512xf32> to vector<8x128xf32>
    %27 = arith.negf %26 : vector<8x128xf32>
    %28 = math.exp %27 : vector<8x128xf32>
    %cst_19 = arith.constant 1.000000e+00 : f32
    %29 = vector.broadcast %cst_19 : f32 to vector<8x128xf32>
    %30 = arith.addf %29, %28 : vector<8x128xf32>
    %31 = arith.divf %29, %30 : vector<8x128xf32>
    %32 = vector.extract_strided_slice %19 {offsets = [0, 256], sizes = [8, 128], strides = [1, 1]} : vector<8x512xf32> to vector<8x128xf32>
    %33 = math.tanh %32 : vector<8x128xf32>
    %34 = vector.extract_strided_slice %19 {offsets = [0, 384], sizes = [8, 128], strides = [1, 1]} : vector<8x512xf32> to vector<8x128xf32>
    %35 = arith.negf %34 : vector<8x128xf32>
    %36 = math.exp %35 : vector<8x128xf32>
    %cst_20 = arith.constant 1.000000e+00 : f32
    %37 = vector.broadcast %cst_20 : f32 to vector<8x128xf32>
    %38 = arith.addf %37, %36 : vector<8x128xf32>
    %39 = arith.divf %37, %38 : vector<8x128xf32>
    %40 = arith.mulf %31, %13 : vector<8x128xf32>
    %41 = arith.mulf %25, %33 : vector<8x128xf32>
    %42 = arith.addf %40, %41 : vector<8x128xf32>
    %43 = math.tanh %42 : vector<8x128xf32>
    %44 = arith.mulf %39, %43 : vector<8x128xf32>
    %c1_i32 = arith.constant 1 : i32
    %c0_21 = arith.constant 0 : index
    %c0_22 = arith.constant 0 : index
    %45 = vector.load %arg10[%c0_21, %c0_22] : memref<8x128xf32, #tpu.memory_space<vmem>>, vector<8x128xf32>
    tpu.vector_store %arg10[%c0_21, %c0_22], %44 {strides = array<i32>} : memref<8x128xf32, #tpu.memory_space<vmem>>, vector<8x128xf32>,
    %c0_23 = arith.constant 0 : index
    %c0_24 = arith.constant 0 : index
    %46 = vector.load %arg11[%c0_23, %c0_24] : memref<8x128xf32, #tpu.memory_space<vmem>>, vector<8x128xf32>
    tpu.vector_store %arg11[%c0_23, %c0_24], %42 {strides = array<i32>} : memref<8x128xf32, #tpu.memory_space<vmem>>, vector<8x128xf32>,
    %c0_i32_25 = arith.constant 0 : i32
    %47 = arith.cmpi eq, %arg1, %c0_i32_25 : i32
    %48 = arith.extui %47 : i1 to i32
    %c0_i32_26 = arith.constant 0 : i32
    %49 = arith.cmpi ne, %48, %c0_i32_26 : i32
    scf.if %49 {
      %c0_27 = arith.constant 0 : index
      %c0_28 = arith.constant 0 : index
      %50 = vector.load %arg6[%c0_27, %c0_28] : memref<1x128xf32, #tpu.memory_space<vmem>>, vector<1x128xf32>
      %51 = vector.broadcast %50 : vector<1x128xf32> to vector<8x128xf32>
      %52 = arith.mulf %44, %51 : vector<8x128xf32>
      %cst_29 = arith.constant dense<0.000000e+00> : vector<8xf32>
      %53 = vector.multi_reduction <add>, %52, %cst_29 [1] : vector<8x128xf32> to vector<8xf32>
      %54 = vector.shape_cast %53 : vector<8xf32> to vector<8x1xf32>
      %c0_30 = arith.constant 0 : index
      %55 = memref.load %arg7[%c0_30] : memref<1xf32, #tpu.memory_space<smem>>
      %56 = vector.broadcast %55 : f32 to vector<8x1xf32>
      %57 = arith.addf %54, %56 : vector<8x1xf32>
      %58 = arith.negf %57 : vector<8x1xf32>
      %59 = math.exp %58 : vector<8x1xf32>
      %cst_31 = arith.constant 1.000000e+00 : f32
      %60 = vector.broadcast %cst_31 : f32 to vector<8x1xf32>
      %61 = arith.addf %60, %59 : vector<8x1xf32>
      %62 = arith.divf %60, %61 : vector<8x1xf32>
      %c0_32 = arith.constant 0 : index
      %c0_33 = arith.constant 0 : index
      %63 = vector.load %arg8[%c0_32, %c0_33] : memref<8x1xf32, #tpu.memory_space<vmem>>, vector<8x1xf32>
      tpu.vector_store %arg8[%c0_32, %c0_33], %62 {strides = array<i32>} : memref<8x1xf32, #tpu.memory_space<vmem>>, vector<8x1xf32>,
    } else {
    }
    return
  }
  func.func @transform_0(%arg0: i32, %arg1: i32) -> (i32, i32, i32) {
    %c0_i32 = arith.constant 0 : i32
    %c0_i32_0 = arith.constant 0 : i32
    return %arg0, %arg1, %c0_i32 : i32, i32, i32
  }
  func.func @transform_1(%arg0: i32, %arg1: i32) -> (i32, i32) {
    %c0_i32 = arith.constant 0 : i32
    %c0_i32_0 = arith.constant 0 : i32
    %c0_i32_1 = arith.constant 0 : i32
    return %c0_i32, %c0_i32_0 : i32, i32
  }
  func.func @transform_2(%arg0: i32, %arg1: i32) -> (i32, i32) {
    %c0_i32 = arith.constant 0 : i32
    %c0_i32_0 = arith.constant 0 : i32
    %c0_i32_1 = arith.constant 0 : i32
    return %c0_i32, %c0_i32_0 : i32, i32
  }
  func.func @transform_3(%arg0: i32, %arg1: i32) -> (i32, i32) {
    %c0_i32 = arith.constant 0 : i32
    %c0_i32_0 = arith.constant 0 : i32
    %c0_i32_1 = arith.constant 0 : i32
    return %c0_i32, %c0_i32_0 : i32, i32
  }
  func.func @transform_4(%arg0: i32, %arg1: i32) -> (i32, i32) {
    %c0_i32 = arith.constant 0 : i32
    %c0_i32_0 = arith.constant 0 : i32
    %c0_i32_1 = arith.constant 0 : i32
    return %c0_i32, %c0_i32_0 : i32, i32
  }
  func.func @transform_5(%arg0: i32, %arg1: i32) -> i32 {
    %c0_i32 = arith.constant 0 : i32
    %c0_i32_0 = arith.constant 0 : i32
    return %c0_i32 : i32
  }
  func.func @transform_6(%arg0: i32, %arg1: i32) -> (i32, i32) {
    %c0_i32 = arith.constant 0 : i32
    %c0_i32_0 = arith.constant 0 : i32
    return %arg0, %c0_i32 : i32, i32
  }
}

</mosaic_0001>

<llo_original>
// kernel: tpu_custom_call.1
$region0: #{tpu_custom_call.1}
  #allocation0 [shape = 'u32[]', space=smem, size = 0x4, offset = 0x4, fixed_abs, tag = 'smem constant byte address 0x4 - core index']
  #allocation1 [shape = 'u32[144,128]{1,0:T(1,128)}', space=vmem, size = 0x12000, scoped, tag = 'internal scratch']
  #allocation2 [shape = 'f32[8,512]{1,0:T(8,128)}', space=vmem, size = 0x4000, scoped, tag = 'scratch operand']
  #allocation3 [shape = 'f32[8,128]{1,0:T(8,128)}', space=vmem, size = 0x1000, scoped, tag = 'scratch operand']
  #allocation4 [shape = 'f32[8,128]{1,0:T(8,128)}', space=vmem, size = 0x1000, scoped, tag = 'scratch operand']
  #allocation5 [shape = 'f32[1]{0:T(128)S(6)}', space=smem, size = 0x200, scoped, tag = 'scoped memory for tpu_custom_call.1']
  %s0 = inlined_call_operand.hbm [shape: f32[1,8,16], index: 0, kind: input, shape index: {}]
  %s1 = inlined_call_operand.hbm [shape: f32[16,512], index: 1, kind: input, shape index: {}]
  %s2 = inlined_call_operand.hbm [shape: f32[128,512], index: 2, kind: input, shape index: {}]
  %s3 = inlined_call_operand.vmem [shape: f32[1,512], index: 3, kind: input, shape index: {}]
  %s4 = inlined_call_operand.vmem [shape: f32[1,128], index: 4, kind: input, shape index: {}]
  %s5 = inlined_call_operand.<no memory space> [shape: f32[1], index: 5, kind: input, shape index: {}]
  %s6 = inlined_call_operand.vmem [shape: f32[8,1], index: 6, kind: output, shape index: {}]
  %s7 = sld [smem:[#allocation0]]
  $region54: #{tpu_custom_call.1} parent=0
    _
  %s9 = ssub.s32 1, %s7
  %s10 = scalar_select 0, %s9, %s7
  %11 = sst [smem:[#allocation5]] %s5
  $region1: #{tpu_custom_call.1} parent=0
    #allocation6 [shape = 'u8[4096]{0}', space=vmem, size = 0x1000, scoped, tag = 'input window, operand 0, single buffered']
    #allocation7 [shape = 's32[1]{0}', space=sflag, size = 0x4, scoped, tag = 'scoped memory for tpu_custom_call.1']
    #allocation8 [shape = 'u8[32768]{0}', space=vmem, size = 0x8000, scoped, tag = 'input window, operand 1, single buffered']
    #allocation9 [shape = 's32[1]{0}', space=sflag, size = 0x4, scoped, tag = 'scoped memory for tpu_custom_call.1']
    #allocation10 [shape = 'u8[262144]{0}', space=vmem, size = 0x40000, scoped, tag = 'input window, operand 2, single buffered']
    %12 = vsyncpa [#allocation7], 0
    %13 = vsyncpa [#allocation9], 0
    // Predicated region
    $region2: #{tpu_custom_call.1} parent=1 // pred_check
      _
    $region3: #{tpu_custom_call.1} parent=1 // pred_check_branch
      %15 = sbr.rel (0) target = $region5
    $region4: #{tpu_custom_call.1} parent=1 // pred_region
      %s17 = ssub.s32 128, 128
      %18 = vsyncadd [#allocation7], %s17
      %s20 = sshll.u32 [#allocation6], 4
      %s21 = int_to_ptr.vmem [resolvable:$true] %s20
      %23 = dma.hbm_to_vmem [thread:$0]  %s0, 128, %s21, [#allocation7]
    $region5: #{tpu_custom_call.1} parent=1 // pred_fallthru
      _
    // Predicated region
    $region6: #{tpu_custom_call.1} parent=1 // pred_check
      _
    $region7: #{tpu_custom_call.1} parent=1 // pred_check_branch
      %25 = sbr.rel (0) target = $region9
    $region8: #{tpu_custom_call.1} parent=1 // pred_region
      %s27 = ssub.s32 1024, 1024
      %28 = vsyncadd [#allocation9], %s27
      %s29 = sshll.u32 [#allocation8], 4
      %s30 = int_to_ptr.vmem [resolvable:$true] %s29
      %35 = dma.hbm_to_vmem [thread:$0]  %s1, 1024, %s30, [#allocation9], 512, 512, 32
    $region9: #{tpu_custom_call.1} parent=1 // pred_fallthru
      _
    // Predicated region
    $region10: #{tpu_custom_call.1} parent=1 // pred_check
      _
    $region11: #{tpu_custom_call.1} parent=1 // pred_check_branch
      %37 = sbr.rel (0) target = $region13
    $region12: #{tpu_custom_call.1} parent=1 // pred_region
      %s39 = ssub.s32 8192, 8192
      %40 = vsyncadd [#allocation9], %s39
      %s41 = sshll.u32 [#allocation10], 4
      %s42 = int_to_ptr.vmem [resolvable:$true] %s41
      %47 = dma.hbm_to_vmem [thread:$0]  %s2, 8192, %s42, [#allocation9], 512, 512, 32
    $region13: #{tpu_custom_call.1} parent=1 // pred_fallthru
      _
    // Predicated region
    $region14: #{tpu_custom_call.1} parent=1 // pred_check
      _
    $region15: #{tpu_custom_call.1} parent=1 // pred_check_branch
      %49 = sbr.rel (0) target = $region17
    $region16: #{tpu_custom_call.1} parent=1 // pred_region
      _
    $region17: #{tpu_custom_call.1} parent=1 // pred_fallthru
      _
    // Predicated region
    $region18: #{tpu_custom_call.1} parent=1 // pred_check
      _
    $region19: #{tpu_custom_call.1} parent=1 // pred_check_branch
      %51 = sbr.rel (0) target = $region21
    $region20: #{tpu_custom_call.1} parent=1 // pred_region
      _
    $region21: #{tpu_custom_call.1} parent=1 // pred_fallthru
      _
    // Predicated region
    $region22: #{tpu_custom_call.1} parent=1 // pred_check
      _
    $region23: #{tpu_custom_call.1} parent=1 // pred_check_branch
      %53 = sbr.rel (0) target = $region25
    $region24: #{tpu_custom_call.1} parent=1 // pred_region
      _
    $region25: #{tpu_custom_call.1} parent=1 // pred_fallthru
      _
    // Predicated region
    $region26: #{tpu_custom_call.1} parent=1 // pred_check
      _
    $region27: #{tpu_custom_call.1} parent=1 // pred_check_branch
      %55 = sbr.rel (0) target = $region29
    $region28: #{tpu_custom_call.1} parent=1 // pred_region
      %56 = dma.done [#allocation7], 128
    $region29: #{tpu_custom_call.1} parent=1 // pred_fallthru
      _
    // Predicated region
    $region30: #{tpu_custom_call.1} parent=1 // pred_check
      _
    $region31: #{tpu_custom_call.1} parent=1 // pred_check_branch
      %58 = sbr.rel (0) target = $region33
    $region32: #{tpu_custom_call.1} parent=1 // pred_region
      %59 = dma.done [#allocation9], 1024
    $region33: #{tpu_custom_call.1} parent=1 // pred_fallthru
      _
    // Predicated region
    $region34: #{tpu_custom_call.1} parent=1 // pred_check
      _
    $region35: #{tpu_custom_call.1} parent=1 // pred_check_branch
      %61 = sbr.rel (0) target = $region37
    $region36: #{tpu_custom_call.1} parent=1 // pred_region
      %62 = dma.done [#allocation9], 8192
    $region37: #{tpu_custom_call.1} parent=1 // pred_fallthru
      _
    %p63 = scmp.eq.s32.totalorder 0, 0
    // Predicated region
    $region38: #{tpu_custom_call.1} parent=1 // pred_check
      %p64 = pneg %p63
    $region39: #{tpu_custom_call.1} parent=1 // pred_check_branch
      %66 = sbr.rel (%p64) target = $region41
    $region40: #{tpu_custom_call.1} parent=1 // pred_region
      %67 = vst [vmem:[#allocation3] sm:$0xff] 0.0
      %68 = vst [vmem:[#allocation4] sm:$0xff] 0.0
    $region41: #{tpu_custom_call.1} parent=1 // pred_fallthru
      _
    %v69 = vld [vmem:[#allocation6] sm:$0xff]
    %v70 = vld [vmem:[#allocation8] sm:$0xff]
    %v71 = vld [vmem:[#allocation8 + $0x8] sm:$0xff]
    %v72 = vld [vmem:[#allocation8 + $0x10] sm:$0xff]
    %v73 = vld [vmem:[#allocation8 + $0x18] sm:$0xff]
    %v74 = vld [vmem:[#allocation8 + $0x20] sm:$0xff]
    %v75 = vld [vmem:[#allocation8 + $0x28] sm:$0xff]
    %v76 = vld [vmem:[#allocation8 + $0x30] sm:$0xff]
    %v77 = vld [vmem:[#allocation8 + $0x38] sm:$0xff]
    %v78 = vld [vmem:[%s3] sm:$0xf]
    %v80 = vlaneseq
    %v81 = vshrl.u32 %v80, 7
    %v82 = vsub.s32 0, %v81
    %v83 = vrot.slane %v78, %v82
    %v84 = vlaneseq
    %v85 = vshrl.u32 %v84, 7
    %v86 = vsub.s32 1, %v85
    %v87 = vrot.slane %v78, %v86
    %v88 = vlaneseq
    %v89 = vshrl.u32 %v88, 7
    %v90 = vsub.s32 2, %v89
    %v91 = vrot.slane %v78, %v90
    %v92 = vlaneseq
    %v93 = vshrl.u32 %v92, 7
    %v94 = vsub.s32 3, %v93
    %v95 = vrot.slane %v78, %v94
    %vm100 = vcmask 130048
    %v102 = vsel %vm100, %v69, 0
    %104 = vmatprep.subr.mxu0 %v71
    %105 = vmatpush1.msra.mxu0 %v70
    %106 = vmatprep.subr.mxu0 %v75
    %107 = vmatpush1.msra.mxu0 %v74
    %108 = vmatprep.subr.mxu0 0.0
    %109 = vmatpush1.msra.mxu0 0.0
    %110 = vmatprep.subr.mxu0 0.0
    %111 = vmatpush1.msra.mxu0 0.0
    %112 = vmatprep.subr.mxu0 0.0
    %113 = vmatpush1.msra.mxu0 0.0
    %114 = vmatprep.subr.mxu0 0.0
    %115 = vmatpush1.msra.mxu0 0.0
    %116 = vmatprep.subr.mxu0 0.0
    %117 = vmatpush1.msra.mxu0 0.0
    %118 = vmatprep.subr.mxu0 0.0
    %119 = vmatpush1.msra.mxu0 0.0
    %120 = vmatprep.subr.mxu0 0.0
    %121 = vmatpush1.msra.mxu0 0.0
    %122 = vmatprep.subr.mxu0 0.0
    %123 = vmatpush1.msra.mxu0 0.0
    %124 = vmatprep.subr.mxu0 0.0
    %125 = vmatpush1.msra.mxu0 0.0
    %126 = vmatprep.subr.mxu0 0.0
    %127 = vmatpush1.msra.mxu0 0.0
    %128 = vmatprep.subr.mxu0 0.0
    %129 = vmatpush1.msra.mxu0 0.0
    %130 = vmatprep.subr.mxu0 0.0
    %131 = vmatpush1.msra.mxu0 0.0
    %132 = vmatprep.subr.mxu0 0.0
    %133 = vmatpush1.msra.mxu0 0.0
    %134 = vmatprep.subr.mxu0 0.0
    %135 = vmatpush1.msra.mxu0 0.0
    %136 = vmatprep.subr.mxu0 0.0
    %137 = vmatpush1.msra.mxu0 0.0
    %138 = vmatprep.subr.mxu0 0.0
    %139 = vmatpush1.msra.mxu0 0.0
    %140 = vmatprep.subr.mxu0 0.0
    %141 = vmatpush1.msra.mxu0 0.0
    %142 = vmatprep.subr.mxu0 0.0
    %143 = vmatpush1.msra.mxu0 0.0
    %144 = vmatprep.subr.mxu0 0.0
    %145 = vmatpush1.msra.mxu0 0.0
    %146 = vmatprep.subr.mxu0 0.0
    %147 = vmatpush1.msra.mxu0 0.0
    %148 = vmatprep.subr.mxu0 0.0
    %149 = vmatpush1.msra.mxu0 0.0
    %150 = vmatprep.subr.mxu0 0.0
    %151 = vmatpush1.msra.mxu0 0.0
    %152 = vmatprep.subr.mxu0 0.0
    %153 = vmatpush1.msra.mxu0 0.0
    %154 = vmatprep.subr.mxu0 0.0
    %155 = vmatpush1.msra.mxu0 0.0
    %156 = vmatprep.subr.mxu0 0.0
    %157 = vmatpush1.msra.mxu0 0.0
    %158 = vmatprep.subr.mxu0 0.0
    %159 = vmatpush1.msra.mxu0 0.0
    %160 = vmatprep.subr.mxu0 0.0
    %161 = vmatpush1.msra.mxu0 0.0
    %162 = vmatprep.subr.mxu0 0.0
    %163 = vmatpush1.msra.mxu0 0.0
    %164 = vmatprep.subr.mxu0 0.0
    %165 = vmatpush1.msra.mxu0 0.0
    %166 = vmatprep.subr.mxu0 0.0
    %167 = vmatpush1.msra.mxu0 0.0
    %168 = vmatprep.mubr.f32.mxu0 0.0
    %169 = vmatmul.mubr.f32.gmra.mrb[0].mxu0 %v102
    %v170 = vpop.f32.mrb[0].mxu0
    %v171 = vadd.f32 %v83, %v170
    %v172 = vpop.f32.mrb[0].mxu0
    %v173 = vadd.f32 %v87, %v172
    %174 = vdwg.mxu0
    %175 = vmatprep.subr.mxu0 %v73
    %176 = vmatpush1.msra.mxu0 %v72
    %177 = vmatprep.subr.mxu0 %v77
    %178 = vmatpush1.msra.mxu0 %v76
    %179 = vmatprep.subr.mxu0 0.0
    %180 = vmatpush1.msra.mxu0 0.0
    %181 = vmatprep.subr.mxu0 0.0
    %182 = vmatpush1.msra.mxu0 0.0
    %183 = vmatprep.subr.mxu0 0.0
    %184 = vmatpush1.msra.mxu0 0.0
    %185 = vmatprep.subr.mxu0 0.0
    %186 = vmatpush1.msra.mxu0 0.0
    %187 = vmatprep.subr.mxu0 0.0
    %188 = vmatpush1.msra.mxu0 0.0
    %189 = vmatprep.subr.mxu0 0.0
    %190 = vmatpush1.msra.mxu0 0.0
    %191 = vmatprep.subr.mxu0 0.0
    %192 = vmatpush1.msra.mxu0 0.0
    %193 = vmatprep.subr.mxu0 0.0
    %194 = vmatpush1.msra.mxu0 0.0
    %195 = vmatprep.subr.mxu0 0.0
    %196 = vmatpush1.msra.mxu0 0.0
    %197 = vmatprep.subr.mxu0 0.0
    %198 = vmatpush1.msra.mxu0 0.0
    %199 = vmatprep.subr.mxu0 0.0
    %200 = vmatpush1.msra.mxu0 0.0
    %201 = vmatprep.subr.mxu0 0.0
    %202 = vmatpush1.msra.mxu0 0.0
    %203 = vmatprep.subr.mxu0 0.0
    %204 = vmatpush1.msra.mxu0 0.0
    %205 = vmatprep.subr.mxu0 0.0
    %206 = vmatpush1.msra.mxu0 0.0
    %207 = vmatprep.subr.mxu0 0.0
    %208 = vmatpush1.msra.mxu0 0.0
    %209 = vmatprep.subr.mxu0 0.0
    %210 = vmatpush1.msra.mxu0 0.0
    %211 = vmatprep.subr.mxu0 0.0
    %212 = vmatpush1.msra.mxu0 0.0
    %213 = vmatprep.subr.mxu0 0.0
    %214 = vmatpush1.msra.mxu0 0.0
    %215 = vmatprep.subr.mxu0 0.0
    %216 = vmatpush1.msra.mxu0 0.0
    %217 = vmatprep.subr.mxu0 0.0
    %218 = vmatpush1.msra.mxu0 0.0
    %219 = vmatprep.subr.mxu0 0.0
    %220 = vmatpush1.msra.mxu0 0.0
    %221 = vmatprep.subr.mxu0 0.0
    %222 = vmatpush1.msra.mxu0 0.0
    %223 = vmatprep.subr.mxu0 0.0
    %224 = vmatpush1.msra.mxu0 0.0
    %225 = vmatprep.subr.mxu0 0.0
    %226 = vmatpush1.msra.mxu0 0.0
    %227 = vmatprep.subr.mxu0 0.0
    %228 = vmatpush1.msra.mxu0 0.0
    %229 = vmatprep.subr.mxu0 0.0
    %230 = vmatpush1.msra.mxu0 0.0
    %231 = vmatprep.subr.mxu0 0.0
    %232 = vmatpush1.msra.mxu0 0.0
    %233 = vmatprep.subr.mxu0 0.0
    %234 = vmatpush1.msra.mxu0 0.0
    %235 = vmatprep.subr.mxu0 0.0
    %236 = vmatpush1.msra.mxu0 0.0
    %237 = vmatprep.subr.mxu0 0.0
    %238 = vmatpush1.msra.mxu0 0.0
    %239 = vmatprep.mubr.f32.mxu0 0.0
    %240 = vmatmul.mubr.f32.gmra.mrb[0].mxu0 %v102
    %v241 = vpop.f32.mrb[0].mxu0
    %v242 = vadd.f32 %v91, %v241
    %v243 = vpop.f32.mrb[0].mxu0
    %v244 = vadd.f32 %v95, %v243
    %245 = vdwg.mxu0
    %246 = vst [vmem:[#allocation2] sm:$0xff] %v171
    %247 = vst [vmem:[#allocation2 + $0x8] sm:$0xff] %v173
    %248 = vst [vmem:[#allocation2 + $0x10] sm:$0xff] %v242
    %249 = vst [vmem:[#allocation2 + $0x18] sm:$0xff] %v244
    %v250 = vld [vmem:[#allocation10] sm:$0xff]
    %v251 = vld [vmem:[#allocation10 + $0x8] sm:$0xff]
    %v252 = vld [vmem:[#allocation10 + $0x10] sm:$0xff]
    %v253 = vld [vmem:[#allocation10 + $0x18] sm:$0xff]
    %v254 = vld [vmem:[#allocation10 + $0x20] sm:$0xff]
    %v255 = vld [vmem:[#allocation10 + $0x28] sm:$0xff]
    %v256 = vld [vmem:[#allocation10 + $0x30] sm:$0xff]
    %v257 = vld [vmem:[#allocation10 + $0x38] sm:$0xff]
    %v258 = vld [vmem:[#allocation10 + $0x40] sm:$0xff]
    %v259 = vld [vmem:[#allocation10 + $0x48] sm:$0xff]
    %v260 = vld [vmem:[#allocation10 + $0x50] sm:$0xff]
    %v261 = vld [vmem:[#allocation10 + $0x58] sm:$0xff]
    %v262 = vld [vmem:[#allocation10 + $0x60] sm:$0xff]
    %v263 = vld [vmem:[#allocation10 + $0x68] sm:$0xff]
    %v264 = vld [vmem:[#allocation10 + $0x70] sm:$0xff]
    %v265 = vld [vmem:[#allocation10 + $0x78] sm:$0xff]
    %v266 = vld [vmem:[#allocation10 + $0x80] sm:$0xff]
    %v267 = vld [vmem:[#allocation10 + $0x88] sm:$0xff]
    %v268 = vld [vmem:[#allocation10 + $0x90] sm:$0xff]
    %v269 = vld [vmem:[#allocation10 + $0x98] sm:$0xff]
    %v270 = vld [vmem:[#allocation10 + $0xa0] sm:$0xff]
    %v271 = vld [vmem:[#allocation10 + $0xa8] sm:$0xff]
    %v272 = vld [vmem:[#allocation10 + $0xb0] sm:$0xff]
    %v273 = vld [vmem:[#allocation10 + $0xb8] sm:$0xff]
    %v274 = vld [vmem:[#allocation10 + $0xc0] sm:$0xff]
    %v275 = vld [vmem:[#allocation10 + $0xc8] sm:$0xff]
    %v276 = vld [vmem:[#allocation10 + $0xd0] sm:$0xff]
    %v277 = vld [vmem:[#allocation10 + $0xd8] sm:$0xff]
    %v278 = vld [vmem:[#allocation10 + $0xe0] sm:$0xff]
    %v279 = vld [vmem:[#allocation10 + $0xe8] sm:$0xff]
    %v280 = vld [vmem:[#allocation10 + $0xf0] sm:$0xff]
    %v281 = vld [vmem:[#allocation10 + $0xf8] sm:$0xff]
    %v282 = vld [vmem:[#allocation10 + $0x100] sm:$0xff]
    %v283 = vld [vmem:[#allocation10 + $0x108] sm:$0xff]
    %v284 = vld [vmem:[#allocation10 + $0x110] sm:$0xff]
    %v285 = vld [vmem:[#allocation10 + $0x118] sm:$0xff]
    %v286 = vld [vmem:[#allocation10 + $0x120] sm:$0xff]
    %v287 = vld [vmem:[#allocation10 + $0x128] sm:$0xff]
    %v288 = vld [vmem:[#allocation10 + $0x130] sm:$0xff]
    %v289 = vld [vmem:[#allocation10 + $0x138] sm:$0xff]
    %v290 = vld [vmem:[#allocation10 + $0x140] sm:$0xff]
    %v291 = vld [vmem:[#allocation10 + $0x148] sm:$0xff]
    %v292 = vld [vmem:[#allocation10 + $0x150] sm:$0xff]
    %v293 = vld [vmem:[#allocation10 + $0x158] sm:$0xff]
    %v294 = vld [vmem:[#allocation10 + $0x160] sm:$0xff]
    %v295 = vld [vmem:[#allocation10 + $0x168] sm:$0xff]
    %v296 = vld [vmem:[#allocation10 + $0x170] sm:$0xff]
    %v297 = vld [vmem:[#allocation10 + $0x178] sm:$0xff]
    %v298 = vld [vmem:[#allocation10 + $0x180] sm:$0xff]
    %v299 = vld [vmem:[#allocation10 + $0x188] sm:$0xff]
    %v300 = vld [vmem:[#allocation10 + $0x190] sm:$0xff]
    %v301 = vld [vmem:[#allocation10 + $0x198] sm:$0xff]
    %v302 = vld [vmem:[#allocation10 + $0x1a0] sm:$0xff]
    %v303 = vld [vmem:[#allocation10 + $0x1a8] sm:$0xff]
    %v304 = vld [vmem:[#allocation10 + $0x1b0] sm:$0xff]
    %v305 = vld [vmem:[#allocation10 + $0x1b8] sm:$0xff]
    %v306 = vld [vmem:[#allocation10 + $0x1c0] sm:$0xff]
    %v307 = vld [vmem:[#allocation10 + $0x1c8] sm:$0xff]
    %v308 = vld [vmem:[#allocation10 + $0x1d0] sm:$0xff]
    %v309 = vld [vmem:[#allocation10 + $0x1d8] sm:$0xff]
    %v310 = vld [vmem:[#allocation10 + $0x1e0] sm:$0xff]
    %v311 = vld [vmem:[#allocation10 + $0x1e8] sm:$0xff]
    %v312 = vld [vmem:[#allocation10 + $0x1f0] sm:$0xff]
    %v313 = vld [vmem:[#allocation10 + $0x1f8] sm:$0xff]
    %v314 = vld [vmem:[#allocation3] sm:$0xff]
    %v315 = vld [vmem:[#allocation4] sm:$0xff]
    %s316 = smul.u32 0, 4
    %s317 = smul.addr %s316, 8
    %s318 = scalar_lea.vmem [#allocation2], %s317
    %v319 = vld [vmem:[%s318] sm:$0xff]
    %v320 = vld [vmem:[%s318 + $0x8] sm:$0xff]
    %v321 = vld [vmem:[%s318 + $0x10] sm:$0xff]
    %v322 = vld [vmem:[%s318 + $0x18] sm:$0xff]
    %323 = vmatprep.subr.mxu0 %v251
    %324 = vmatpush1.msra.mxu0 %v250
    %325 = vmatprep.subr.mxu0 %v255
    %326 = vmatpush1.msra.mxu0 %v254
    %327 = vmatprep.subr.mxu0 %v259
    %328 = vmatpush1.msra.mxu0 %v258
    %329 = vmatprep.subr.mxu0 %v263
    %330 = vmatpush1.msra.mxu0 %v262
    %331 = vmatprep.subr.mxu0 %v267
    %332 = vmatpush1.msra.mxu0 %v266
    %333 = vmatprep.subr.mxu0 %v271
    %334 = vmatpush1.msra.mxu0 %v270
    %335 = vmatprep.subr.mxu0 %v275
    %336 = vmatpush1.msra.mxu0 %v274
    %337 = vmatprep.subr.mxu0 %v279
    %338 = vmatpush1.msra.mxu0 %v278
    %339 = vmatprep.subr.mxu0 %v283
    %340 = vmatpush1.msra.mxu0 %v282
    %341 = vmatprep.subr.mxu0 %v287
    %342 = vmatpush1.msra.mxu0 %v286
    %343 = vmatprep.subr.mxu0 %v291
    %344 = vmatpush1.msra.mxu0 %v290
    %345 = vmatprep.subr.mxu0 %v295
    %346 = vmatpush1.msra.mxu0 %v294
    %347 = vmatprep.subr.mxu0 %v299
    %348 = vmatpush1.msra.mxu0 %v298
    %349 = vmatprep.subr.mxu0 %v303
    %350 = vmatpush1.msra.mxu0 %v302
    %351 = vmatprep.subr.mxu0 %v307
    %352 = vmatpush1.msra.mxu0 %v306
    %353 = vmatprep.subr.mxu0 %v311
    %354 = vmatpush1.msra.mxu0 %v310
    %355 = vmatprep.subr.mxu0 0.0
    %356 = vmatpush1.msra.mxu0 0.0
    %357 = vmatprep.subr.mxu0 0.0
    %358 = vmatpush1.msra.mxu0 0.0
    %359 = vmatprep.subr.mxu0 0.0
    %360 = vmatpush1.msra.mxu0 0.0
    %361 = vmatprep.subr.mxu0 0.0
    %362 = vmatpush1.msra.mxu0 0.0
    %363 = vmatprep.subr.mxu0 0.0
    %364 = vmatpush1.msra.mxu0 0.0
    %365 = vmatprep.subr.mxu0 0.0
    %366 = vmatpush1.msra.mxu0 0.0
    %367 = vmatprep.subr.mxu0 0.0
    %368 = vmatpush1.msra.mxu0 0.0
    %369 = vmatprep.subr.mxu0 0.0
    %370 = vmatpush1.msra.mxu0 0.0
    %371 = vmatprep.subr.mxu0 0.0
    %372 = vmatpush1.msra.mxu0 0.0
    %373 = vmatprep.subr.mxu0 0.0
    %374 = vmatpush1.msra.mxu0 0.0
    %375 = vmatprep.subr.mxu0 0.0
    %376 = vmatpush1.msra.mxu0 0.0
    %377 = vmatprep.subr.mxu0 0.0
    %378 = vmatpush1.msra.mxu0 0.0
    %379 = vmatprep.subr.mxu0 0.0
    %380 = vmatpush1.msra.mxu0 0.0
    %381 = vmatprep.subr.mxu0 0.0
    %382 = vmatpush1.msra.mxu0 0.0
    %383 = vmatprep.subr.mxu0 0.0
    %384 = vmatpush1.msra.mxu0 0.0
    %385 = vmatprep.subr.mxu0 0.0
    %386 = vmatpush1.msra.mxu0 0.0
    %387 = vmatprep.mubr.f32.mxu0 0.0
    %388 = vmatmul.mubr.f32.gmra.mrb[0].mxu0 %v314
    %v389 = vpop.f32.mrb[0].mxu0
    %v390 = vadd.f32 0.0, %v389
    %v391 = vpop.f32.mrb[0].mxu0
    %v392 = vadd.f32 0.0, %v391
    %393 = vdwg.mxu0
    %394 = vmatprep.subr.mxu0 %v253
    %395 = vmatpush1.msra.mxu0 %v252
    %396 = vmatprep.subr.mxu0 %v257
    %397 = vmatpush1.msra.mxu0 %v256
    %398 = vmatprep.subr.mxu0 %v261
    %399 = vmatpush1.msra.mxu0 %v260
    %400 = vmatprep.subr.mxu0 %v265
    %401 = vmatpush1.msra.mxu0 %v264
    %402 = vmatprep.subr.mxu0 %v269
    %403 = vmatpush1.msra.mxu0 %v268
    %404 = vmatprep.subr.mxu0 %v273
    %405 = vmatpush1.msra.mxu0 %v272
    %406 = vmatprep.subr.mxu0 %v277
    %407 = vmatpush1.msra.mxu0 %v276
    %408 = vmatprep.subr.mxu0 %v281
    %409 = vmatpush1.msra.mxu0 %v280
    %410 = vmatprep.subr.mxu0 %v285
    %411 = vmatpush1.msra.mxu0 %v284
    %412 = vmatprep.subr.mxu0 %v289
    %413 = vmatpush1.msra.mxu0 %v288
    %414 = vmatprep.subr.mxu0 %v293
    %415 = vmatpush1.msra.mxu0 %v292
    %416 = vmatprep.subr.mxu0 %v297
    %417 = vmatpush1.msra.mxu0 %v296
    %418 = vmatprep.subr.mxu0 %v301
    %419 = vmatpush1.msra.mxu0 %v300
    %420 = vmatprep.subr.mxu0 %v305
    %421 = vmatpush1.msra.mxu0 %v304
    %422 = vmatprep.subr.mxu0 %v309
    %423 = vmatpush1.msra.mxu0 %v308
    %424 = vmatprep.subr.mxu0 %v313
    %425 = vmatpush1.msra.mxu0 %v312
    %426 = vmatprep.subr.mxu0 0.0
    %427 = vmatpush1.msra.mxu0 0.0
    %428 = vmatprep.subr.mxu0 0.0
    %429 = vmatpush1.msra.mxu0 0.0
    %430 = vmatprep.subr.mxu0 0.0
    %431 = vmatpush1.msra.mxu0 0.0
    %432 = vmatprep.subr.mxu0 0.0
    %433 = vmatpush1.msra.mxu0 0.0
    %434 = vmatprep.subr.mxu0 0.0
    %435 = vmatpush1.msra.mxu0 0.0
    %436 = vmatprep.subr.mxu0 0.0
    %437 = vmatpush1.msra.mxu0 0.0
    %438 = vmatprep.subr.mxu0 0.0
    %439 = vmatpush1.msra.mxu0 0.0
    %440 = vmatprep.subr.mxu0 0.0
    %441 = vmatpush1.msra.mxu0 0.0
    %442 = vmatprep.subr.mxu0 0.0
    %443 = vmatpush1.msra.mxu0 0.0
    %444 = vmatprep.subr.mxu0 0.0
    %445 = vmatpush1.msra.mxu0 0.0
    %446 = vmatprep.subr.mxu0 0.0
    %447 = vmatpush1.msra.mxu0 0.0
    %448 = vmatprep.subr.mxu0 0.0
    %449 = vmatpush1.msra.mxu0 0.0
    %450 = vmatprep.subr.mxu0 0.0
    %451 = vmatpush1.msra.mxu0 0.0
    %452 = vmatprep.subr.mxu0 0.0
    %453 = vmatpush1.msra.mxu0 0.0
    %454 = vmatprep.subr.mxu0 0.0
    %455 = vmatpush1.msra.mxu0 0.0
    %456 = vmatprep.subr.mxu0 0.0
    %457 = vmatpush1.msra.mxu0 0.0
    %458 = vmatprep.mubr.f32.mxu0 0.0
    %459 = vmatmul.mubr.f32.gmra.mrb[0].mxu0 %v314
    %v460 = vpop.f32.mrb[0].mxu0
    %v461 = vadd.f32 0.0, %v460
    %v462 = vpop.f32.mrb[0].mxu0
    %v463 = vadd.f32 0.0, %v462
    %464 = vdwg.mxu0
    %v465 = vadd.f32 %v319, %v390
    %v466 = vadd.f32 %v320, %v392
    %v467 = vadd.f32 %v321, %v461
    %v468 = vadd.f32 %v322, %v463
    %v469 = vxor.u32 %v465, 2147483648
    %v470 = vmul.f32 %v469, 1.442695
    %v471 = vpow.pop %v470
    %v472 = vadd.f32 %v471, 1.0
    %v473 = vrcp.pop %v472
    %v474 = vmul.f32 1.0, %v473
    %v475 = vxor.u32 %v466, 2147483648
    %v476 = vmul.f32 %v475, 1.442695
    %v477 = vpow.pop %v476
    %v478 = vadd.f32 %v477, 1.0
    %v479 = vrcp.pop %v478
    %v480 = vmul.f32 1.0, %v479
    %v481 = vtanh.pop %v467
    %v482 = vxor.u32 %v468, 2147483648
    %v483 = vmul.f32 %v482, 1.442695
    %v484 = vpow.pop %v483
    %v485 = vadd.f32 %v484, 1.0
    %v486 = vrcp.pop %v485
    %v487 = vmul.f32 1.0, %v486
    %v488 = vmul.f32 %v480, %v315
    %v489 = vmul.f32 %v474, %v481
    %v490 = vadd.f32 %v488, %v489
    %v491 = vtanh.pop %v490
    %v492 = vmul.f32 %v487, %v491
    %493 = vst [vmem:[#allocation3] sm:$0xff] %v492
    %494 = vst [vmem:[#allocation4] sm:$0xff] %v490
    // Predicated region
    $region42: #{tpu_custom_call.1} parent=1 // pred_check
      %p495 = pneg %p63
    $region43: #{tpu_custom_call.1} parent=1 // pred_check_branch
      %497 = sbr.rel (%p495) target = $region45
    $region44: #{tpu_custom_call.1} parent=1 // pred_region
      %v498 = vld [vmem:[%s4] sm:$0x1]
      %v500 = vlaneseq
      %v501 = vshrl.u32 %v500, 7
      %v502 = vsub.s32 0, %v501
      %v503 = vrot.slane %v498, %v502
      %v505 = vmul.f32 %v492, %v503
      %506 = vadd.xlane.f32.xlu0 %v505
      %v507 = vpop.xlane.xlu0 %506
      %s508 = sld [smem:[#allocation5]]
      %v509 = vstv %s508
      %v510 = vadd.f32 %v507, %v509
      %v511 = vxor.u32 %v510, 2147483648
      %v512 = vmul.f32 %v511, 1.442695
      %v513 = vpow.pop %v512
      %v514 = vadd.f32 %v513, 1.0
      %v515 = vrcp.pop %v514
      %v516 = vmul.f32 1.0, %v515
      %vm517 = vcmask 7168
      %518 = vst.msk [vmem:[%s6] sm:$0xff] %vm517, %v516
    $region45: #{tpu_custom_call.1} parent=1 // pred_fallthru
      _
    // Predicated region
    $region46: #{tpu_custom_call.1} parent=1 // pred_check
      _
    $region47: #{tpu_custom_call.1} parent=1 // pred_check_branch
      %520 = sbr.rel (0) target = $region49
    $region48: #{tpu_custom_call.1} parent=1 // pred_region
      _
    $region49: #{tpu_custom_call.1} parent=1 // pred_fallthru
      _
    // Predicated region
    $region50: #{tpu_custom_call.1} parent=1 // pred_check
      _
    $region51: #{tpu_custom_call.1} parent=1 // pred_check_branch
      %522 = sbr.rel (0) target = $region53
    $region52: #{tpu_custom_call.1} parent=1 // pred_region
      _
    $region53: #{tpu_custom_call.1} parent=1 // pred_fallthru
      _
    %523 = vsyncpa [#allocation7], 1
    %524 = vsyncpa [#allocation9], 1

</llo_original>
